<compile_context>
chip_gen: v5e
topology: v5e:2x2
jax: 0.10.0
libtpu: 0.0.40
codegen_flags: <defaults>
</compile_context>

<pallas_src>
import numpy as np
import jax
import jax.numpy as jnp
from jax import lax
from jax.experimental import pallas as pl
from jax.experimental.pallas import tpu as pltpu


def _round_up(a, b):
    return ((a + b - 1) // b) * b


def init_initial_block_params(key, in_channels, out_channels):
    assert out_channels > in_channels, "out_channels should be larger than in_channels."
    c_conv = out_channels - in_channels
    ks = jax.random.split(key, 4)
    return {
        "conv_w": 0.1 * jax.random.normal(ks[0], (c_conv, in_channels, 3, 3), jnp.float32),
        "bn_gamma": 1.0 + 0.1 * jax.random.normal(ks[1], (c_conv,), jnp.float32),
        "bn_beta": 0.1 * jax.random.normal(ks[2], (c_conv,), jnp.float32),
        "bn_mean": 0.1 * jax.random.normal(ks[3], (c_conv,), jnp.float32),
        "bn_var": jnp.linspace(0.5, 1.5, c_conv, dtype=jnp.float32),
        "bn_eps": 1e-5,
    }


def _im2col_taps(x_padded, Ho, Wo):
    """Nine stride-2 shifted views of a spatially padded NCHW tensor -> (9, N, C, Ho, Wo)."""
    vs = []
    for ky in range(3):
        for kx in range(3):
            vs.append(x_padded[:, :, ky:ky + 2 * Ho:2, kx:kx + 2 * Wo:2])
    return jnp.stack(vs, axis=0)


def initial_block(x_nchw, params, *, tm=2048):
    N, C_in, H, W = x_nchw.shape
    w = params["conv_w"]                       # (C_conv, C_in, 3, 3)
    C_conv = w.shape[0]
    C_out = C_conv + C_in
    K = 9 * C_in
    Ho = (H + 2 - 3) // 2 + 1
    Wo = (W + 2 - 3) // 2 + 1
    M = N * Ho * Wo

    x = x_nchw.astype(jnp.float32)
    xz = jnp.pad(x, ((0, 0), (0, 0), (1, 1), (1, 1)))                               # zero pad: conv
    xn = jnp.pad(x, ((0, 0), (0, 0), (1, 1), (1, 1)), constant_values=-jnp.inf)     # -inf pad: maxpool

    # Glue (plain JAX): im2col.  K-index ordering = (c_in, ky, kx) to match
    # conv_w.reshape(C_conv, C_in*9); M-index ordering = (n, i, j).
    tz = _im2col_taps(xz, Ho, Wo)                                   # (9, N, C_in, Ho, Wo)
    tn = _im2col_taps(xn, Ho, Wo)
    cp = jnp.transpose(tz, (2, 0, 1, 3, 4)).reshape(K, M)           # (K, M)        conv patches^T
    pp = jnp.transpose(tn, (0, 2, 1, 3, 4)).reshape(9, C_in, M)     # (9, C_in, M)  pool taps

    # Fold inference BatchNorm: scale goes into the weight, only the shift remains.
    inv_std = 1.0 / jnp.sqrt(params["bn_var"] + params["bn_eps"])
    scale = params["bn_gamma"] * inv_std                                            # (C_conv,)
    shift = (params["bn_beta"] - params["bn_mean"] * scale).reshape(C_conv, 1).astype(jnp.float32)
    w_folded = (w.reshape(C_conv, K) * scale[:, None]).astype(jnp.bfloat16)

    # bf16 MXU inputs for the matmul; the pool path stays f32 (exact value selection).
    cp = cp.astype(jnp.bfloat16)

    # Tile the pixel (lane) axis: cdiv grid + zero-padded tail.
    tm = min(tm, _round_up(M, 128))
    M_pad = _round_up(M, tm)
    cp = jnp.pad(cp, ((0, 0), (0, M_pad - M)))
    pp = jnp.pad(pp, ((0, 0), (0, 0), (0, M_pad - M)))

    def kernel(cp_ref, pp_ref, w_ref, b_ref, o_ref):
        # Conv branch: single bf16 MXU matmul, f32 accumulate, folded-BN shift + ReLU.
        conv = jnp.dot(w_ref[...], cp_ref[...], preferred_element_type=jnp.float32)
        conv = jnp.maximum(conv + b_ref[...], 0.0)
        # MaxPool branch: running 9-tap maximum on the VPU (f32, -inf padded taps).
        pool = pp_ref[0]
        for k in range(1, 9):
            pool = jnp.maximum(pool, pp_ref[k])
        # Channel concat written directly into the lane-dense (C_out, tm) output block.
        o_ref[:C_conv, :] = conv.astype(o_ref.dtype)
        o_ref[C_conv:, :] = pool.astype(o_ref.dtype)

    out_flat = pl.pallas_call(
        kernel,
        out_shape=jax.ShapeDtypeStruct((C_out, M_pad), jnp.float32),
        grid=(M_pad // tm,),
        in_specs=[
            pl.BlockSpec((K, tm), lambda i: (0, i)),            # conv patches^T
            pl.BlockSpec((9, C_in, tm), lambda i: (0, 0, i)),   # pool taps
            pl.BlockSpec((C_conv, K), lambda i: (0, 0)),        # folded weight (bf16)
            pl.BlockSpec((C_conv, 1), lambda i: (0, 0)),        # BN shift
        ],
        out_specs=pl.BlockSpec((C_out, tm), lambda i: (0, i)),
        compiler_params=pltpu.CompilerParams(dimension_semantics=("parallel",)),
    )(cp, pp, w_folded, shift)

    out = out_flat[:, :M].reshape(C_out, N, Ho, Wo)
    return jnp.transpose(out, (1, 0, 2, 3))                     # back to NCHW


def initial_block_reference(x_nchw, params):
    """Pure-JAX (f32) reference mirroring the PyTorch forward (eval-mode BN)."""
    x = x_nchw.astype(jnp.float32)
    conv = lax.conv_general_dilated(
        x, params["conv_w"].astype(jnp.float32),
        window_strides=(2, 2), padding=((1, 1), (1, 1)),
        dimension_numbers=("NCHW", "OIHW", "NCHW"))
    inv_std = 1.0 / jnp.sqrt(params["bn_var"] + params["bn_eps"])
    g = (params["bn_gamma"] * inv_std)[None, :, None, None]
    conv = (conv - params["bn_mean"][None, :, None, None]) * g + params["bn_beta"][None, :, None, None]
    conv = jnp.maximum(conv, 0.0)
    pool = lax.reduce_window(
        x, -jnp.inf, lax.max,
        window_dimensions=(1, 1, 3, 3), window_strides=(1, 1, 2, 2),
        padding=((0, 0), (0, 0), (1, 1), (1, 1)))
    return jnp.concatenate([conv, pool], axis=1)


if __name__ == "__main__":
    # TODO(synk): act_type is fixed to 'relu'; other activations from the hub only
    # change the final elementwise op in the kernel.
    # TODO(synk): BatchNorm is the folded inference (running-stats) form; training-mode
    # batch statistics are not implemented.
    N, C_in, H, W = 2, 4, 16, 16
    C_out = 16
    key = jax.random.PRNGKey(0)
    kx, kp = jax.random.split(key)
    x = jax.random.normal(kx, (N, C_in, H, W), jnp.float32)
    params = init_initial_block_params(kp, C_in, C_out)

    out = jax.block_until_ready(initial_block(x, params))
    assert out.shape == (N, C_out, H // 2, W // 2), out.shape

    ref = jax.block_until_ready(initial_block_reference(x, params))
    # Conv branch uses bf16 MXU inputs -> compare against the f32 reference with a
    # bf16-level tolerance; the maxpool branch is bit-exact.
    err = float(np.max(np.abs(np.asarray(out) - np.asarray(ref))))
    assert np.allclose(np.asarray(out), np.asarray(ref), atol=3e-2, rtol=3e-2), err
    print("KERNEL_OK")
</pallas_src>

<mosaic_0001>
module attributes {stable_mosaic.version = 11 : i64} {
  func.func @kernel(%arg0: i32, %arg1: memref<36x128xbf16, #tpu.memory_space<vmem>>, %arg2: memref<9x4x128xf32, #tpu.memory_space<vmem>>, %arg3: memref<12x36xbf16, #tpu.memory_space<vmem>>, %arg4: memref<12x1xf32, #tpu.memory_space<vmem>>, %arg5: memref<16x128xf32, #tpu.memory_space<vmem>>) attributes {dimension_semantics = [#tpu.dimension_semantics<parallel>], iteration_bounds = array<i64: 1>, scalar_prefetch = 0 : i64, scratch_operands = 0 : i64, tpu.core_type = #tpu.core_type<tc>, window_params = [{transform_indices = @transform_0, window_bounds = array<i64: 36, 128>}, {transform_indices = @transform_1, window_bounds = array<i64: 9, 4, 128>}, {pipeline_mode = #tpu.pipeline_mode<synchronous>, transform_indices = @transform_2, window_bounds = array<i64: 12, 36>}, {pipeline_mode = #tpu.pipeline_mode<synchronous>, transform_indices = @transform_3, window_bounds = array<i64: 12, 1>}, {transform_indices = @transform_4, window_bounds = array<i64: 16, 128>}]} {
    %c0 = arith.constant 0 : index
    %c0_0 = arith.constant 0 : index
    %0 = vector.load %arg3[%c0, %c0_0] : memref<12x36xbf16, #tpu.memory_space<vmem>>, vector<12x36xbf16>
    %c0_1 = arith.constant 0 : index
    %c0_2 = arith.constant 0 : index
    %1 = vector.load %arg1[%c0_1, %c0_2] : memref<36x128xbf16, #tpu.memory_space<vmem>>, vector<36x128xbf16>
    %cst = arith.constant dense<0.000000e+00> : vector<12x128xf32>
    %2 = tpu.matmul %0, %1, %cst {dimension_numbers = #tpu.dot_dimension_numbers<[1], [0], [0], [1], [0, 0, 1, 1], [], []>} : vector<12x36xbf16>, vector<36x128xbf16>, vector<12x128xf32> -> vector<12x128xf32>
    %c0_3 = arith.constant 0 : index
    %c0_4 = arith.constant 0 : index
    %3 = vector.load %arg4[%c0_3, %c0_4] : memref<12x1xf32, #tpu.memory_space<vmem>>, vector<12x1xf32>
    %4 = vector.broadcast %3 : vector<12x1xf32> to vector<12x128xf32>
    %5 = arith.addf %2, %4 : vector<12x128xf32>
    %cst_5 = arith.constant 0.000000e+00 : f32
    %6 = vector.broadcast %cst_5 : f32 to vector<12x128xf32>
    %7 = arith.maximumf %5, %6 : vector<12x128xf32>
    %c0_6 = arith.constant 0 : index
    %c0_7 = arith.constant 0 : index
    %c0_8 = arith.constant 0 : index
    %8 = vector.load %arg2[%c0_6, %c0_7, %c0_8] : memref<9x4x128xf32, #tpu.memory_space<vmem>>, vector<1x4x128xf32>
    %9 = vector.shape_cast %8 : vector<1x4x128xf32> to vector<4x128xf32>
    %c1 = arith.constant 1 : index
    %c0_9 = arith.constant 0 : index
    %c0_10 = arith.constant 0 : index
    %10 = vector.load %arg2[%c1, %c0_9, %c0_10] : memref<9x4x128xf32, #tpu.memory_space<vmem>>, vector<1x4x128xf32>
    %11 = vector.shape_cast %10 : vector<1x4x128xf32> to vector<4x128xf32>
    %12 = arith.maximumf %9, %11 : vector<4x128xf32>
    %c2 = arith.constant 2 : index
    %c0_11 = arith.constant 0 : index
    %c0_12 = arith.constant 0 : index
    %13 = vector.load %arg2[%c2, %c0_11, %c0_12] : memref<9x4x128xf32, #tpu.memory_space<vmem>>, vector<1x4x128xf32>
    %14 = vector.shape_cast %13 : vector<1x4x128xf32> to vector<4x128xf32>
    %15 = arith.maximumf %12, %14 : vector<4x128xf32>
    %c3 = arith.constant 3 : index
    %c0_13 = arith.constant 0 : index
    %c0_14 = arith.constant 0 : index
    %16 = vector.load %arg2[%c3, %c0_13, %c0_14] : memref<9x4x128xf32, #tpu.memory_space<vmem>>, vector<1x4x128xf32>
    %17 = vector.shape_cast %16 : vector<1x4x128xf32> to vector<4x128xf32>
    %18 = arith.maximumf %15, %17 : vector<4x128xf32>
    %c4 = arith.constant 4 : index
    %c0_15 = arith.constant 0 : index
    %c0_16 = arith.constant 0 : index
    %19 = vector.load %arg2[%c4, %c0_15, %c0_16] : memref<9x4x128xf32, #tpu.memory_space<vmem>>, vector<1x4x128xf32>
    %20 = vector.shape_cast %19 : vector<1x4x128xf32> to vector<4x128xf32>
    %21 = arith.maximumf %18, %20 : vector<4x128xf32>
    %c5 = arith.constant 5 : index
    %c0_17 = arith.constant 0 : index
    %c0_18 = arith.constant 0 : index
    %22 = vector.load %arg2[%c5, %c0_17, %c0_18] : memref<9x4x128xf32, #tpu.memory_space<vmem>>, vector<1x4x128xf32>
    %23 = vector.shape_cast %22 : vector<1x4x128xf32> to vector<4x128xf32>
    %24 = arith.maximumf %21, %23 : vector<4x128xf32>
    %c6 = arith.constant 6 : index
    %c0_19 = arith.constant 0 : index
    %c0_20 = arith.constant 0 : index
    %25 = vector.load %arg2[%c6, %c0_19, %c0_20] : memref<9x4x128xf32, #tpu.memory_space<vmem>>, vector<1x4x128xf32>
    %26 = vector.shape_cast %25 : vector<1x4x128xf32> to vector<4x128xf32>
    %27 = arith.maximumf %24, %26 : vector<4x128xf32>
    %c7 = arith.constant 7 : index
    %c0_21 = arith.constant 0 : index
    %c0_22 = arith.constant 0 : index
    %28 = vector.load %arg2[%c7, %c0_21, %c0_22] : memref<9x4x128xf32, #tpu.memory_space<vmem>>, vector<1x4x128xf32>
    %29 = vector.shape_cast %28 : vector<1x4x128xf32> to vector<4x128xf32>
    %30 = arith.maximumf %27, %29 : vector<4x128xf32>
    %c8 = arith.constant 8 : index
    %c0_23 = arith.constant 0 : index
    %c0_24 = arith.constant 0 : index
    %31 = vector.load %arg2[%c8, %c0_23, %c0_24] : memref<9x4x128xf32, #tpu.memory_space<vmem>>, vector<1x4x128xf32>
    %32 = vector.shape_cast %31 : vector<1x4x128xf32> to vector<4x128xf32>
    %33 = arith.maximumf %30, %32 : vector<4x128xf32>
    %c0_25 = arith.constant 0 : index
    %c0_26 = arith.constant 0 : index
    %34 = vector.load %arg5[%c0_25, %c0_26] : memref<16x128xf32, #tpu.memory_space<vmem>>, vector<12x128xf32>
    tpu.vector_store %arg5[%c0_25, %c0_26], %7 {strides = array<i32>} : memref<16x128xf32, #tpu.memory_space<vmem>>, vector<12x128xf32>,
    %c12 = arith.constant 12 : index
    %c0_27 = arith.constant 0 : index
    %35 = vector.load %arg5[%c12, %c0_27] : memref<16x128xf32, #tpu.memory_space<vmem>>, vector<4x128xf32>
    tpu.vector_store %arg5[%c12, %c0_27], %33 {strides = array<i32>} : memref<16x128xf32, #tpu.memory_space<vmem>>, vector<4x128xf32>,
    return
  }
  func.func @transform_0(%arg0: i32) -> (i32, i32) {
    %c0_i32 = arith.constant 0 : i32
    %c0_i32_0 = arith.constant 0 : i32
    return %c0_i32, %arg0 : i32, i32
  }
  func.func @transform_1(%arg0: i32) -> (i32, i32, i32) {
    %c0_i32 = arith.constant 0 : i32
    %c0_i32_0 = arith.constant 0 : i32
    %c0_i32_1 = arith.constant 0 : i32
    return %c0_i32, %c0_i32_0, %arg0 : i32, i32, i32
  }
  func.func @transform_2(%arg0: i32) -> (i32, i32) {
    %c0_i32 = arith.constant 0 : i32
    %c0_i32_0 = arith.constant 0 : i32
    %c0_i32_1 = arith.constant 0 : i32
    return %c0_i32, %c0_i32_0 : i32, i32
  }
  func.func @transform_3(%arg0: i32) -> (i32, i32) {
    %c0_i32 = arith.constant 0 : i32
    %c0_i32_0 = arith.constant 0 : i32
    %c0_i32_1 = arith.constant 0 : i32
    return %c0_i32, %c0_i32_0 : i32, i32
  }
  func.func @transform_4(%arg0: i32) -> (i32, i32) {
    %c0_i32 = arith.constant 0 : i32
    %c0_i32_0 = arith.constant 0 : i32
    return %c0_i32, %arg0 : i32, i32
  }
}

</mosaic_0001>

<llo_original>
// kernel: tpu_custom_call.1
$region0: #{tpu_custom_call.1}
  #allocation0 [shape = 'u32[]', space=smem, size = 0x4, offset = 0x4, fixed_abs, tag = 'smem constant byte address 0x4 - core index']
  #allocation1 [shape = 'u32[72,128]{1,0:T(1,128)}', space=vmem, size = 0x9000, scoped, tag = 'internal scratch']
  %s0 = inlined_call_operand.hbm [shape: bf16[36,128], index: 0, kind: input, shape index: {}]
  %s1 = inlined_call_operand.hbm [shape: f32[9,4,128], index: 1, kind: input, shape index: {}]
  %s2 = inlined_call_operand.vmem [shape: bf16[12,36], index: 2, kind: input, shape index: {}]
  %s3 = inlined_call_operand.vmem [shape: f32[12,1], index: 3, kind: input, shape index: {}]
  %s4 = inlined_call_operand.hbm [shape: f32[16,128], index: 4, kind: output, shape index: {}]
  %s5 = sld [smem:[#allocation0]]
  $region34: #{tpu_custom_call.1} parent=0
    _
  %s7 = ssub.s32 1, %s5
  %s8 = scalar_select 0, %s7, %s5
  $region1: #{tpu_custom_call.1} parent=0
    #allocation2 [shape = 'u8[10240]{0}', space=vmem, size = 0x2800, scoped, tag = 'input window, operand 0, single buffered']
    #allocation3 [shape = 's32[1]{0}', space=sflag, size = 0x4, scoped, tag = 'scoped memory for tpu_custom_call.1']
    #allocation4 [shape = 's32[1]{0}', space=sflag, size = 0x4, scoped, tag = 'scoped memory for tpu_custom_call.1']
    #allocation5 [shape = 'u8[18432]{0}', space=vmem, size = 0x4800, scoped, tag = 'input window, operand 1, single buffered']
    #allocation6 [shape = 's32[1]{0}', space=sflag, size = 0x4, scoped, tag = 'scoped memory for tpu_custom_call.1']
    #allocation7 [shape = 'u8[8192]{0}', space=vmem, size = 0x2000, scoped, tag = 'output window, operand 0, single buffered']
    %9 = vsyncpa [#allocation3], 0
    %10 = vsyncpa [#allocation6], 0
    %11 = vsyncpa [#allocation4], 0
    // Predicated region
    $region2: #{tpu_custom_call.1} parent=1 // pred_check
      _
    $region3: #{tpu_custom_call.1} parent=1 // pred_check_branch
      %13 = sbr.rel (0) target = $region5
    $region4: #{tpu_custom_call.1} parent=1 // pred_region
      %15 = vsyncadd [#allocation3], 0
      %s16 = sshll.u32 %s0, 4
      %s17 = int_to_ptr.hbm [resolvable:$true] %s16
      %s18 = sshll.u32 [#allocation2], 4
      %s19 = int_to_ptr.vmem [resolvable:$true] %s18
      %24 = dma.hbm_to_vmem [thread:$0]  %s17, 320, %s19, [#allocation3], 64, 64, 4
    $region5: #{tpu_custom_call.1} parent=1 // pred_fallthru
      _
    // Predicated region
    $region6: #{tpu_custom_call.1} parent=1 // pred_check
      _
    $region7: #{tpu_custom_call.1} parent=1 // pred_check_branch
      %26 = sbr.rel (0) target = $region9
    $region8: #{tpu_custom_call.1} parent=1 // pred_region
      %28 = vsyncadd [#allocation6], 0
      %s29 = sshll.u32 %s1, 4
      %s30 = int_to_ptr.hbm [resolvable:$true] %s29
      %s31 = sshll.u32 [#allocation5], 4
      %s32 = int_to_ptr.vmem [resolvable:$true] %s31
      %37 = dma.hbm_to_vmem [thread:$0]  %s30, 576, %s32, [#allocation6], 64, 64, 4
    $region9: #{tpu_custom_call.1} parent=1 // pred_fallthru
      _
    // Predicated region
    $region10: #{tpu_custom_call.1} parent=1 // pred_check
      _
    $region11: #{tpu_custom_call.1} parent=1 // pred_check_branch
      %39 = sbr.rel (0) target = $region13
    $region12: #{tpu_custom_call.1} parent=1 // pred_region
      _
    $region13: #{tpu_custom_call.1} parent=1 // pred_fallthru
      _
    // Predicated region
    $region14: #{tpu_custom_call.1} parent=1 // pred_check
      _
    $region15: #{tpu_custom_call.1} parent=1 // pred_check_branch
      %41 = sbr.rel (0) target = $region17
    $region16: #{tpu_custom_call.1} parent=1 // pred_region
      _
    $region17: #{tpu_custom_call.1} parent=1 // pred_fallthru
      _
    // Predicated region
    $region18: #{tpu_custom_call.1} parent=1 // pred_check
      _
    $region19: #{tpu_custom_call.1} parent=1 // pred_check_branch
      %43 = sbr.rel (0) target = $region21
    $region20: #{tpu_custom_call.1} parent=1 // pred_region
      %45 = dma.done [#allocation3], 320
    $region21: #{tpu_custom_call.1} parent=1 // pred_fallthru
      _
    // Predicated region
    $region22: #{tpu_custom_call.1} parent=1 // pred_check
      _
    $region23: #{tpu_custom_call.1} parent=1 // pred_check_branch
      %47 = sbr.rel (0) target = $region25
    $region24: #{tpu_custom_call.1} parent=1 // pred_region
      %49 = dma.done [#allocation6], 576
    $region25: #{tpu_custom_call.1} parent=1 // pred_fallthru
      _
    %v51 = vld [vmem:[%s2] sm:$0xf]
    %v52 = vld [vmem:[%s2 + $0x4] sm:$0x3]
    %v53 = vld [vmem:[#allocation2] sm:$0xf]
    %v54 = vld [vmem:[#allocation2 + $0x4] sm:$0xf]
    %v55 = vld [vmem:[#allocation2 + $0x8] sm:$0xf]
    %v56 = vld [vmem:[#allocation2 + $0xc] sm:$0xf]
    %v57 = vld [vmem:[#allocation2 + $0x10] sm:$0x3]
    %v58 = vld [vmem:[%s3] sm:$0xff]
    %v59 = vld [vmem:[%s3 + $0x8] sm:$0xf]
    %61 = vset.pattern.permute.xlu0 0
    %62 = vperm.xlu0 %61, %v58
    %v63 = vpop.permute.xlu0 %62
    %66 = vset.pattern.permute.xlu0 0
    %67 = vperm.xlu0 %66, %v59
    %v68 = vpop.permute.xlu0 %67
    %v72 = vunpack.c.l.b16 %v51
    %v73 = vunpack.c.l.b16 %v52
    %v74 = vpack.c.b16 %v73, %v72
    %v80 = vunpack.c.l.b16 %v53
    %v81 = vunpack.c.l.b16 %v54
    %v82 = vunpack.c.l.b16 %v55
    %v83 = vunpack.c.l.b16 %v56
    %v84 = vunpack.c.l.b16 %v57
    %v85 = vpack.c.b16 %v81, %v80
    %v86 = vpack.c.b16 %v83, %v82
    %v87 = vpack.c.b16 %v84, %v84
    %vm90 = vcmask 293888
    %v92 = vsel %vm90, %v74, 0
    %vm94 = vcmask 1041408
    %v96 = vsel %vm94, %v87, 0
    %98 = vmatpush.bf16.msra.mxu0 0
    %99 = vmatpush.bf16.msra.mxu0 0
    %100 = vmatpush.bf16.msra.mxu0 0
    %101 = vmatpush.bf16.msra.mxu0 0
    %102 = vmatpush.bf16.msra.mxu0 0
    %103 = vmatpush.bf16.msra.mxu0 %v96
    %104 = vmatpush.bf16.msra.mxu0 %v86
    %105 = vmatpush.bf16.msra.mxu0 %v85
    %106 = vmatmul.bf16.gmra.mxu0 %v92
    %v107 = vpop.f32.mrf.mxu0
    %v108 = vadd.f32 %v63, %v107
    %v109 = vpop.f32.mrf.mxu0
    %v110 = vadd.f32 %v68, %v109
    %111 = vdwg.mxu0
    %v112 = vmax.f32 %v108, 0.0
    %v113 = vmax.f32 %v110, 0.0
    %v114 = vld [vmem:[#allocation5] sm:$0xf]
    %s115 = scalar_lea.vmem [#allocation5], 4
    %v116 = vld [vmem:[%s115] sm:$0xf]
    %v117 = vmax.f32 %v114, %v116
    %s118 = scalar_lea.vmem [#allocation5], 8
    %v119 = vld [vmem:[%s118] sm:$0xf]
    %v120 = vmax.f32 %v117, %v119
    %s121 = scalar_lea.vmem [#allocation5], 12
    %v122 = vld [vmem:[%s121] sm:$0xf]
    %v123 = vmax.f32 %v120, %v122
    %s124 = scalar_lea.vmem [#allocation5], 16
    %v125 = vld [vmem:[%s124] sm:$0xf]
    %v126 = vmax.f32 %v123, %v125
    %s127 = scalar_lea.vmem [#allocation5], 20
    %v128 = vld [vmem:[%s127] sm:$0xf]
    %v129 = vmax.f32 %v126, %v128
    %s130 = scalar_lea.vmem [#allocation5], 24
    %v131 = vld [vmem:[%s130] sm:$0xf]
    %v132 = vmax.f32 %v129, %v131
    %s133 = scalar_lea.vmem [#allocation5], 28
    %v134 = vld [vmem:[%s133] sm:$0xf]
    %v135 = vmax.f32 %v132, %v134
    %s136 = scalar_lea.vmem [#allocation5], 32
    %v137 = vld [vmem:[%s136] sm:$0xf]
    %v138 = vmax.f32 %v135, %v137
    %139 = vst [vmem:[#allocation7] sm:$0xff] %v112
    %140 = vst [vmem:[#allocation7 + $0x8] sm:$0xf] %v113
    %141 = vst [vmem:[#allocation7 + $0xc] sm:$0xf] %v138
    // Predicated region
    $region26: #{tpu_custom_call.1} parent=1 // pred_check
      _
    $region27: #{tpu_custom_call.1} parent=1 // pred_check_branch
      %143 = sbr.rel (0) target = $region29
    $region28: #{tpu_custom_call.1} parent=1 // pred_region
      %145 = vsyncadd [#allocation4], 0
      %s146 = sshll.u32 [#allocation7], 4
      %s147 = int_to_ptr.vmem [resolvable:$true] %s146
      %s148 = sshll.u32 %s4, 4
      %s149 = int_to_ptr.hbm [resolvable:$true] %s148
      %154 = dma.vmem_to_hbm [thread:$0]  %s147, 256, %s149, [#allocation4], 128, 128, 8
    $region29: #{tpu_custom_call.1} parent=1 // pred_fallthru
      _
    // Predicated region
    $region30: #{tpu_custom_call.1} parent=1 // pred_check
      _
    $region31: #{tpu_custom_call.1} parent=1 // pred_check_branch
      %156 = sbr.rel (0) target = $region33
    $region32: #{tpu_custom_call.1} parent=1 // pred_region
      %158 = dma.done [#allocation4], 256
    $region33: #{tpu_custom_call.1} parent=1 // pred_fallthru
      _
    %159 = vsyncpa [#allocation3], 1
    %160 = vsyncpa [#allocation6], 1
    %161 = vsyncpa [#allocation4], 1

</llo_original>
